<compile_context>
chip_gen: v5e
topology: v5e:2x2
jax: 0.10.0
libtpu: 0.0.40
codegen_flags: <defaults>
</compile_context>

<pallas_src>
import functools

import numpy as np
import jax
import jax.numpy as jnp
from jax.experimental import pallas as pl
from jax.experimental.pallas import tpu as pltpu

_LANE = 128


def _round_up(n, m):
    return ((n + m - 1) // m) * m


@functools.lru_cache(maxsize=None)
def _vmem_limit_bytes():
    """~80% of physical VMEM (128 MiB on v5e/v6e, 64 MiB on v7x): leaves headroom for
    Mosaic-internal scratch / temporaries while not wasting half the chip's VMEM."""
    cap = 64 * 1024 * 1024                      # conservative (v7x-sized) fallback
    try:
        info = pltpu.get_tpu_info()
        cap = int(getattr(info, "vmem_capacity_bytes", cap)) or cap
    except Exception:
        pass
    return int(cap * 0.8)


def _pick_channel_tile(dims, vmem_budget):
    """Largest channel tile (multiple of 128) dividing every dim; capped at 256 on
    small-VMEM parts (v7x) so one grid step + double buffers stays well under budget."""
    cands = (512, 256, 128) if vmem_budget >= 80 * 1024 * 1024 else (256, 128)
    for t in cands:
        if all(d % t == 0 for d in dims):
            return t
    return 128                                   # padded channel counts are 128-multiples


def _pick_hw_tiling(HW):
    """(HWp, thw): pad + tile the flattened spatial axis so the memory-bound kernels get
    >=256-row (preferably ~512-1024-row) tiles to pipeline DMA against compute."""
    HWp = _round_up(HW, 16)
    if HWp <= 1024:
        return HWp, HWp
    for t in range(1024, 255, -8):               # largest 8-aligned divisor in [256,1024]
        if HWp % t == 0:
            return HWp, t
    HWp = _round_up(HW, 512)                     # no clean divisor: pad spatially instead
    return HWp, 512


# -----------------------------------------------------------------------------
# Static helper matrices / masks (pure glue; built once in numpy from static shapes).
# -----------------------------------------------------------------------------
def adaptive_avg_pool_matrix(out_size: int, in_size: int) -> np.ndarray:
    """P (out_size, in_size) reproducing torch AdaptiveAvgPool window means."""
    P = np.zeros((out_size, in_size), dtype=np.float32)
    for i in range(out_size):
        start = (i * in_size) // out_size
        a = (i + 1) * in_size
        end = -((-a) // out_size)                # ceil((i+1)*in/out)
        P[i, start:end] = 1.0 / float(end - start)
    return P


def bilinear_align_corners_matrix(out_size: int, in_size: int) -> np.ndarray:
    """M (out_size, in_size): F.interpolate(mode='bilinear', align_corners=True), 1 axis."""
    M = np.zeros((out_size, in_size), dtype=np.float32)
    if in_size == 1:
        M[:, 0] = 1.0
        return M
    if out_size == 1:
        M[0, 0] = 1.0
        return M
    scale = (in_size - 1) / (out_size - 1)
    for h in range(out_size):
        src = h * scale
        i0 = min(int(np.floor(src)), in_size - 1)
        i1 = min(i0 + 1, in_size - 1)
        frac = np.float32(src - i0)
        M[h, i0] += 1.0 - frac
        M[h, i1] += frac
    return M


def dx_boundary_masks(H: int, W: int, HWp: int) -> np.ndarray:
    """(HWp, 2): col 0 = valid for dx=-1 taps (x > 0), col 1 = valid for dx=+1 (x < W-1).
    Vertical (dy) boundaries need no mask: the bottleneck kernel keeps zero halo rows."""
    m = np.zeros((HWp, 2), np.float32)
    x = np.arange(H * W) % W
    m[:H * W, 0] = (x > 0).astype(np.float32)
    m[:H * W, 1] = (x < W - 1).astype(np.float32)
    return m


# -----------------------------------------------------------------------------
# Kernel A: pooled pyramid levels + 1x1 conv + folded BN  ->  tiny (N, SS_pad, Coutp)
# -----------------------------------------------------------------------------
def _pool_conv_pallas(x_p, p_tiles, w1_all, sh_all, *, thw, row_off, ss_pad, vmem_limit):
    N, HWp, Cfp = x_p.shape
    n_hw = HWp // thw
    nst, _, Coutp = w1_all.shape
    SS_pad = p_tiles.shape[1]

    def kernel(x_ref, p_ref, w1_ref, sh_ref, y_ref, acc_ref):
        j = pl.program_id(1)

        @pl.when(j == 0)
        def _init():
            acc_ref[...] = jnp.zeros_like(acc_ref)

        # adaptive-avg-pool of every pyramid level in one stacked MXU matmul,
        # accumulated over the spatial tiles.
        acc_ref[...] += jnp.dot(p_ref[0], x_ref[0], preferred_element_type=jnp.float32)

        @pl.when(j == n_hw - 1)
        def _finalize():
            for s in range(nst):
                r0, rp = row_off[s], ss_pad[s]
                pooled = acc_ref[r0:r0 + rp, :].astype(jnp.bfloat16)
                y_ref[0, r0:r0 + rp, :] = (
                    jnp.dot(pooled, w1_ref[s], preferred_element_type=jnp.float32)
                    + sh_ref[s])                               # folded-BN shift

    return pl.pallas_call(
        kernel,
        out_shape=jax.ShapeDtypeStruct((N, SS_pad, Coutp), jnp.float32),
        grid=(N, n_hw),
        in_specs=[
            pl.BlockSpec((1, thw, Cfp), lambda n, j: (n, j, 0)),
            pl.BlockSpec((1, SS_pad, thw), lambda n, j: (j, 0, 0)),
            pl.BlockSpec((nst, Cfp, Coutp), lambda n, j: (0, 0, 0)),
            pl.BlockSpec((nst, 1, Coutp), lambda n, j: (0, 0, 0)),
        ],
        out_specs=pl.BlockSpec((1, SS_pad, Coutp), lambda n, j: (n, 0, 0)),
        scratch_shapes=[pltpu.VMEM((SS_pad, Cfp), jnp.float32)],
        compiler_params=pltpu.CompilerParams(
            dimension_semantics=("parallel", "arbitrary"),
            vmem_limit_bytes=vmem_limit),
    )(x_p, p_tiles, w1_all, sh_all)


# -----------------------------------------------------------------------------
# Kernel C: on-the-fly upsample/concat + 3x3 conv (padding=1, no bias) + folded BN
# -----------------------------------------------------------------------------
def _bottleneck_pallas(y_all, u_arrays, u_index, x_p, w9p, masks, sh9, *,
                       H, W, HWp, ss_list, row_off, ct_tile, cout_tile, vmem_limit):
    N, _, Cfp = x_p.shape
    Coutp = w9p.shape[-1]
    SS_pad = y_all.shape[1]
    nst = len(ss_list)
    nu = len(u_arrays)
    n_cpb = Coutp // ct_tile                     # prior channel blocks per pyramid level
    n_ct_prio = nst * n_cpb
    n_ct = n_ct_prio + Cfp // ct_tile
    n_cout = Coutp // cout_tile
    HW = H * W
    Wh = _round_up(W + 1, 16)                    # zero-halo rows above/below the image

    def kernel(*refs):
        y_ref = refs[0]
        u_refs = refs[1:1 + nu]
        x_ref, w_ref, m_ref, sh_ref, o_ref, zt_buf = refs[1 + nu:]
        c = pl.program_id(2)

        @pl.when(c == 0)
        def _init():
            o_ref[...] = jnp.zeros_like(o_ref)

        # ---- build this channel tile's (HWp, ct_tile) activation inside the haloed
        #      scratch: priors are re-upsampled on the fly from the tiny kernel-A
        #      output, feats stream straight from the input (no concat buffer / no
        #      HBM round trip for feats). ----
        for s in range(nst):
            @pl.when(c // n_cpb == s)
            def _prior(s=s):
                r0, ss = row_off[s], ss_list[s]
                ys = y_ref[0, r0:r0 + ss, :].astype(jnp.bfloat16)      # (ss, ct_tile)
                if ss == 1:              # 1x1 level: bilinear upsample == broadcast
                    zt_buf[Wh:Wh + HWp, :] = jnp.broadcast_to(ys, (HWp, ct_tile))
                else:
                    zt_buf[Wh:Wh + HWp, :] = jnp.dot(
                        u_refs[u_index[s]][...], ys,
                        preferred_element_type=jnp.float32).astype(jnp.bfloat16)

        @pl.when(c >= n_ct_prio)
        def _feats():
            zt_buf[Wh:Wh + HWp, :] = x_ref[0]

        # zero halos + spatial padding so vertically out-of-image taps read exact zeros
        zt_buf[0:Wh, :] = jnp.zeros((Wh, ct_tile), jnp.bfloat16)
        zt_buf[Wh + HW:2 * Wh + HWp, :] = jnp.zeros((Wh + HWp - HW, ct_tile),
                                                    jnp.bfloat16)

        # ---- 3x3 conv: each tap is a static shifted slice of the haloed bf16 tile,
        #      a horizontal-boundary mask for dx != 0, and one bf16 MXU matmul.
        #      Partial sums accumulate in fp32 directly in the resident output block. ----
        m_all = m_ref[...]                                             # (HWp, 2) bf16
        part = None
        for t in range(9):                                             # static unroll
            dy, dx = t // 3 - 1, t % 3 - 1
            off = dy * W + dx
            src = zt_buf[Wh + off:Wh + off + HWp, :]
            if dx != 0:
                col = 0 if dx < 0 else 1
                src = src * m_all[:, col:col + 1]
            prod = jnp.dot(src, w_ref[t], preferred_element_type=jnp.float32)
            part = prod if part is None else part + prod
        o_ref[0] += part

        @pl.when(c == n_ct - 1)
        def _finalize():
            o_ref[0] += sh_ref[...]                                    # folded-BN shift

    in_specs = [
        # tiny pooled+1x1-conv output; its columns track the current prior channel block
        pl.BlockSpec((1, SS_pad, ct_tile),
                     lambda n, jc, c: (n, 0, jnp.remainder(c, n_cpb))),
    ]
    for u in u_arrays:                            # grid-invariant bilinear operators
        in_specs.append(pl.BlockSpec(u.shape, lambda n, jc, c: (0, 0)))
    in_specs += [
        # feats streamed directly for the trailing channel tiles (clamped index map)
        pl.BlockSpec((1, HWp, ct_tile),
                     lambda n, jc, c: (n, 0, jnp.maximum(c - n_ct_prio, 0))),
        pl.BlockSpec((9, ct_tile, cout_tile), lambda n, jc, c: (0, c, jc)),
        pl.BlockSpec(masks.shape, lambda n, jc, c: (0, 0)),
        pl.BlockSpec((1, cout_tile), lambda n, jc, c: (0, jc)),
    ]

    return pl.pallas_call(
        kernel,
        out_shape=jax.ShapeDtypeStruct((N, HWp, Coutp), jnp.float32),
        grid=(N, n_cout, n_ct),
        in_specs=in_specs,
        out_specs=pl.BlockSpec((1, HWp, cout_tile), lambda n, jc, c: (n, 0, jc)),
        scratch_shapes=[pltpu.VMEM((HWp + 2 * Wh, ct_tile), jnp.bfloat16)],
        compiler_params=pltpu.CompilerParams(
            dimension_semantics=("parallel", "parallel", "arbitrary"),
            vmem_limit_bytes=vmem_limit),
    )(y_all, *u_arrays, x_p, w9p, masks, sh9)


# -----------------------------------------------------------------------------
# Parameters + forward wrapper
# -----------------------------------------------------------------------------
def _fold_bn(gamma, beta, mean, var, eps=1e-5):
    scale = gamma / jnp.sqrt(var + eps)
    shift = beta - mean * scale
    return (scale.reshape(1, -1).astype(jnp.float32),
            shift.reshape(1, -1).astype(jnp.float32))


def init_psp_params(key, features, out_features, sizes):
    params = {"stages": [], "sizes": tuple(sizes)}
    for _ in sizes:
        key, k1, k2, k3, k4, k5 = jax.random.split(key, 6)
        w1 = 0.1 * jax.random.normal(k1, (features, out_features), jnp.float32)
        gamma = 1.0 + 0.1 * jax.random.normal(k2, (out_features,), jnp.float32)
        beta = 0.1 * jax.random.normal(k3, (out_features,), jnp.float32)
        rmean = 0.1 * jax.random.normal(k4, (out_features,), jnp.float32)
        rvar = 1.0 + 0.2 * jax.random.uniform(k5, (out_features,), jnp.float32)
        sc, sh = _fold_bn(gamma, beta, rmean, rvar)
        params["stages"].append({"w1": w1, "bn_scale": sc, "bn_shift": sh})

    c_total = features + len(sizes) * out_features
    key, k1, k2, k3, k4, k5 = jax.random.split(key, 6)
    # 3x3 conv weight stored as (9, C_in, C_out) == w[ky*3+kx, cin, cout];
    # input-channel order matches torch.cat(priors + [feats], dim=1).
    w9 = 0.05 * jax.random.normal(k1, (9, c_total, out_features), jnp.float32)
    gamma = 1.0 + 0.1 * jax.random.normal(k2, (out_features,), jnp.float32)
    beta = 0.1 * jax.random.normal(k3, (out_features,), jnp.float32)
    rmean = 0.1 * jax.random.normal(k4, (out_features,), jnp.float32)
    rvar = 1.0 + 0.2 * jax.random.uniform(k5, (out_features,), jnp.float32)
    sc, sh = _fold_bn(gamma, beta, rmean, rvar)
    params["bottleneck"] = {"w9": w9, "bn_scale": sc, "bn_shift": sh}
    return params


def psp_module_forward(feats_nchw, params):
    """PSPModule forward. feats_nchw: (N, C, H, W) fp32 -> (N, out_features, H, W) fp32."""
    N, Cf, H, W = feats_nchw.shape
    sizes = tuple(params["sizes"])
    nst = len(sizes)
    Cout = params["stages"][0]["w1"].shape[1]
    HW = H * W
    Cfp, Coutp = _round_up(Cf, _LANE), _round_up(Cout, _LANE)     # lane-dense channels
    HWp, thw = _pick_hw_tiling(HW)
    n_hw = HWp // thw
    vmem_limit = _vmem_limit_bytes()
    ct_tile = _pick_channel_tile((Coutp, Cfp), vmem_limit)
    cout_tile = _pick_channel_tile((Coutp,), vmem_limit)

    ss_list = [s * s for s in sizes]
    ss_pad = [_round_up(ss, 8) for ss in ss_list]                  # sublane-aligned rows
    row_off = [int(v) for v in np.cumsum([0] + ss_pad[:-1])]
    SS_pad = int(sum(ss_pad))

    # --- one-time glue: NCHW -> (N, HWp, Cfp), padding, bf16 casts, BN folding ---
    x = jnp.transpose(feats_nchw, (0, 2, 3, 1)).reshape(N, HW, Cf)
    x_p = jnp.pad(x, ((0, 0), (0, HWp - HW), (0, Cfp - Cf))).astype(jnp.bfloat16)

    P_all = np.zeros((SS_pad, HWp), np.float32)       # stacked adaptive-avg-pool operator
    u_arrays, u_index = [], {}
    w1_rows, sh_rows = [], []
    for s, (size, st) in enumerate(zip(sizes, params["stages"])):
        P = np.kron(adaptive_avg_pool_matrix(size, H), adaptive_avg_pool_matrix(size, W))
        P_all[row_off[s]:row_off[s] + ss_list[s], :HW] = P
        if ss_list[s] > 1:
            U = np.kron(bilinear_align_corners_matrix(H, size),
                        bilinear_align_corners_matrix(W, size))      # (HW, ss)
            Up = np.zeros((HWp, ss_list[s]), np.float32)
            Up[:HW] = U
            u_index[s] = len(u_arrays)
            u_arrays.append(jnp.asarray(Up, jnp.bfloat16))
        w1_rows.append(jnp.pad(st["w1"] * st["bn_scale"],             # fold BN scale
                               ((0, Cfp - Cf), (0, Coutp - Cout))))
        sh_rows.append(jnp.pad(st["bn_shift"], ((0, 0), (0, Coutp - Cout))))
    p_tiles = jnp.asarray(P_all.reshape(SS_pad, n_hw, thw).transpose(1, 0, 2),
                          jnp.bfloat16)                               # (n_hw, SS_pad, thw)
    w1_all = jnp.stack(w1_rows).astype(jnp.bfloat16)                  # (nst, Cfp, Coutp)
    sh_all = jnp.stack(sh_rows).astype(jnp.float32)                   # (nst, 1, Coutp)

    # kernel A: pooled pyramid levels + 1x1 conv + folded BN -> tiny (N, SS_pad, Coutp)
    y_all = _pool_conv_pallas(x_p, p_tiles, w1_all, sh_all, thw=thw,
                              row_off=row_off, ss_pad=ss_pad, vmem_limit=vmem_limit)

    # bottleneck weights: fold BN scale, scatter into the padded channel layout
    b = params["bottleneck"]
    w9s = b["w9"] * b["bn_scale"]                                     # (9, Ct, Cout)
    Ct_all_p = nst * Coutp + Cfp
    w9p = jnp.zeros((9, Ct_all_p, Coutp), jnp.float32)
    for s in range(nst):
        w9p = w9p.at[:, s * Coutp:s * Coutp + Cout, :Cout].set(
            w9s[:, s * Cout:(s + 1) * Cout, :])
    w9p = w9p.at[:, nst * Coutp:nst * Coutp + Cf, :Cout].set(w9s[:, nst * Cout:, :])
    w9p = w9p.astype(jnp.bfloat16)
    sh9 = jnp.pad(b["bn_shift"], ((0, 0), (0, Coutp - Cout))).astype(jnp.float32)
    masks = jnp.asarray(dx_boundary_masks(H, W, HWp), jnp.bfloat16)

    outp = _bottleneck_pallas(y_all, u_arrays, u_index, x_p, w9p, masks, sh9,
                              H=H, W=W, HWp=HWp, ss_list=ss_list, row_off=row_off,
                              ct_tile=ct_tile, cout_tile=cout_tile,
                              vmem_limit=vmem_limit)                  # (N, HWp, Coutp) f32
    out = outp[:, :HW, :Cout].reshape(N, H, W, Cout)
    return jnp.transpose(out, (0, 3, 1, 2))                           # back to NCHW


# -----------------------------------------------------------------------------
# Pure-jnp fp32 reference (eval-mode BN), mirrors the PyTorch module. Used for checking.
# -----------------------------------------------------------------------------
def psp_reference(feats_nchw, params):
    N, Cf, H, W = feats_nchw.shape
    sizes = params["sizes"]
    HW = H * W
    x = jnp.transpose(feats_nchw, (0, 2, 3, 1)).reshape(N, HW, Cf)
    priors = []
    for size, st in zip(sizes, params["stages"]):
        P = jnp.asarray(np.kron(adaptive_avg_pool_matrix(size, H),
                                adaptive_avg_pool_matrix(size, W)))
        U = jnp.asarray(np.kron(bilinear_align_corners_matrix(H, size),
                                bilinear_align_corners_matrix(W, size)))
        pooled = jnp.einsum("sp,npc->nsc", P, x)
        y = jnp.einsum("nsc,co->nso", pooled, st["w1"]) * st["bn_scale"] + st["bn_shift"]
        priors.append(jnp.einsum("ps,nso->npo", U, y))
    z = jnp.concatenate(priors + [x], axis=-1)
    b = params["bottleneck"]
    Ct = z.shape[-1]
    zp = jnp.pad(z.reshape(N, H, W, Ct), ((0, 0), (1, 1), (1, 1), (0, 0)))
    out = jnp.zeros((N, HW, b["w9"].shape[-1]), jnp.float32)
    for t in range(9):
        dy, dx = t // 3, t % 3
        win = zp[:, dy:dy + H, dx:dx + W, :].reshape(N, HW, Ct)
        out = out + jnp.einsum("npc,co->npo", win, b["w9"][t])
    out = out * b["bn_scale"] + b["bn_shift"]
    return jnp.transpose(out.reshape(N, H, W, -1), (0, 3, 1, 2))


if __name__ == "__main__":
    key = jax.random.PRNGKey(0)
    key, kx, kp = jax.random.split(key, 3)

    N, Cf, H, W = 2, 4, 16, 16
    out_features = 8
    sizes = (1, 2, 3, 6)

    feats = jax.random.normal(kx, (N, Cf, H, W), jnp.float32)   # NCHW, like torch
    params = init_psp_params(kp, Cf, out_features, sizes)

    out = psp_module_forward(feats, params)
    out = jax.block_until_ready(out)

    assert out.shape == (N, out_features, H, W), out.shape
    assert bool(jnp.all(jnp.isfinite(out)))

    # Correctness vs a pure-jnp fp32 reference (loose tolerance: bf16 MXU operands).
    ref = psp_reference(feats, params)
    np.testing.assert_allclose(np.asarray(out), np.asarray(ref), rtol=0.1, atol=0.1)

    print("KERNEL_OK")
</pallas_src>

<mosaic_0001>
module attributes {stable_mosaic.version = 11 : i64} {
  func.func @kernel(%arg0: i32, %arg1: i32, %arg2: memref<1x256x128xbf16, #tpu.memory_space<vmem>>, %arg3: memref<1x72x256xbf16, #tpu.memory_space<vmem>>, %arg4: memref<4x128x128xbf16, #tpu.memory_space<vmem>>, %arg5: memref<4x1x128xf32, #tpu.memory_space<vmem>>, %arg6: memref<1x72x128xf32, #tpu.memory_space<vmem>>, %arg7: memref<72x128xf32, #tpu.memory_space<vmem>>) attributes {dimension_semantics = [#tpu.dimension_semantics<parallel>, #tpu.dimension_semantics<arbitrary>], iteration_bounds = array<i64: 2, 1>, scalar_prefetch = 0 : i64, scratch_operands = 1 : i64, tpu.core_type = #tpu.core_type<tc>, window_params = [{transform_indices = @transform_0, window_bounds = array<i64: 1, 256, 128>}, {transform_indices = @transform_1, window_bounds = array<i64: 1, 72, 256>}, {pipeline_mode = #tpu.pipeline_mode<synchronous>, transform_indices = @transform_2, window_bounds = array<i64: 4, 128, 128>}, {pipeline_mode = #tpu.pipeline_mode<synchronous>, transform_indices = @transform_3, window_bounds = array<i64: 4, 1, 128>}, {transform_indices = @transform_4, window_bounds = array<i64: 1, 72, 128>}]} {
    %c0_i32 = arith.constant 0 : i32
    %0 = arith.cmpi eq, %arg1, %c0_i32 : i32
    %1 = arith.extui %0 : i1 to i32
    %c0_i32_0 = arith.constant 0 : i32
    %2 = arith.cmpi ne, %1, %c0_i32_0 : i32
    scf.if %2 {
      %cst_12 = arith.constant 0.000000e+00 : f32
      %14 = vector.broadcast %cst_12 : f32 to vector<72x128xf32>
      %c0_13 = arith.constant 0 : index
      %c0_14 = arith.constant 0 : index
      %15 = vector.load %arg7[%c0_13, %c0_14] : memref<72x128xf32, #tpu.memory_space<vmem>>, vector<72x128xf32>
      tpu.vector_store %arg7[%c0_13, %c0_14], %14 {strides = array<i32>} : memref<72x128xf32, #tpu.memory_space<vmem>>, vector<72x128xf32>,
    } else {
    }
    %c0 = arith.constant 0 : index
    %c0_1 = arith.constant 0 : index
    %3 = vector.load %arg7[%c0, %c0_1] : memref<72x128xf32, #tpu.memory_space<vmem>>, vector<72x128xf32>
    %c0_2 = arith.constant 0 : index
    %c0_3 = arith.constant 0 : index
    %c0_4 = arith.constant 0 : index
    %4 = vector.load %arg3[%c0_2, %c0_3, %c0_4] : memref<1x72x256xbf16, #tpu.memory_space<vmem>>, vector<1x72x256xbf16>
    %5 = vector.shape_cast %4 : vector<1x72x256xbf16> to vector<72x256xbf16>
    %c0_5 = arith.constant 0 : index
    %c0_6 = arith.constant 0 : index
    %c0_7 = arith.constant 0 : index
    %6 = vector.load %arg2[%c0_5, %c0_6, %c0_7] : memref<1x256x128xbf16, #tpu.memory_space<vmem>>, vector<1x256x128xbf16>
    %7 = vector.shape_cast %6 : vector<1x256x128xbf16> to vector<256x128xbf16>
    %cst = arith.constant dense<0.000000e+00> : vector<72x128xf32>
    %8 = tpu.matmul %5, %7, %cst {dimension_numbers = #tpu.dot_dimension_numbers<[1], [0], [0], [1], [0, 0, 1, 1], [], []>} : vector<72x256xbf16>, vector<256x128xbf16>, vector<72x128xf32> -> vector<72x128xf32>
    %9 = arith.addf %3, %8 : vector<72x128xf32>
    %c0_8 = arith.constant 0 : index
    %c0_9 = arith.constant 0 : index
    %10 = vector.load %arg7[%c0_8, %c0_9] : memref<72x128xf32, #tpu.memory_space<vmem>>, vector<72x128xf32>
    tpu.vector_store %arg7[%c0_8, %c0_9], %9 {strides = array<i32>} : memref<72x128xf32, #tpu.memory_space<vmem>>, vector<72x128xf32>,
    %c0_i32_10 = arith.constant 0 : i32
    %11 = arith.cmpi eq, %arg1, %c0_i32_10 : i32
    %12 = arith.extui %11 : i1 to i32
    %c0_i32_11 = arith.constant 0 : i32
    %13 = arith.cmpi ne, %12, %c0_i32_11 : i32
    scf.if %13 {
      %c0_12 = arith.constant 0 : index
      %c0_13 = arith.constant 0 : index
      %14 = vector.load %arg7[%c0_12, %c0_13] : memref<72x128xf32, #tpu.memory_space<vmem>>, vector<8x128xf32>
      %15 = arith.truncf %14 : vector<8x128xf32> to vector<8x128xbf16>
      %c0_14 = arith.constant 0 : index
      %c0_15 = arith.constant 0 : index
      %c0_16 = arith.constant 0 : index
      %16 = vector.load %arg4[%c0_14, %c0_15, %c0_16] : memref<4x128x128xbf16, #tpu.memory_space<vmem>>, vector<1x128x128xbf16>
      %17 = vector.shape_cast %16 : vector<1x128x128xbf16> to vector<128x128xbf16>
      %cst_17 = arith.constant dense<0.000000e+00> : vector<8x128xf32>
      %18 = tpu.matmul %15, %17, %cst_17 {dimension_numbers = #tpu.dot_dimension_numbers<[1], [0], [0], [1], [0, 0, 1, 1], [], []>} : vector<8x128xbf16>, vector<128x128xbf16>, vector<8x128xf32> -> vector<8x128xf32>
      %c0_18 = arith.constant 0 : index
      %c0_19 = arith.constant 0 : index
      %c0_20 = arith.constant 0 : index
      %19 = vector.load %arg5[%c0_18, %c0_19, %c0_20] : memref<4x1x128xf32, #tpu.memory_space<vmem>>, vector<1x1x128xf32>
      %20 = vector.shape_cast %19 : vector<1x1x128xf32> to vector<1x128xf32>
      %21 = vector.broadcast %20 : vector<1x128xf32> to vector<8x128xf32>
      %22 = arith.addf %18, %21 : vector<8x128xf32>
      %c0_21 = arith.constant 0 : index
      %c0_22 = arith.constant 0 : index
      %c0_23 = arith.constant 0 : index
      %23 = vector.load %arg6[%c0_21, %c0_22, %c0_23] : memref<1x72x128xf32, #tpu.memory_space<vmem>>, vector<1x8x128xf32>
      %24 = vector.shape_cast %23 : vector<1x8x128xf32> to vector<8x128xf32>
      %25 = vector.shape_cast %22 : vector<8x128xf32> to vector<1x8x128xf32>
      tpu.vector_store %arg6[%c0_21, %c0_22, %c0_23], %25 {strides = array<i32>} : memref<1x72x128xf32, #tpu.memory_space<vmem>>, vector<1x8x128xf32>,
      %c8 = arith.constant 8 : index
      %c0_24 = arith.constant 0 : index
      %26 = vector.load %arg7[%c8, %c0_24] : memref<72x128xf32, #tpu.memory_space<vmem>>, vector<8x128xf32>
      %27 = arith.truncf %26 : vector<8x128xf32> to vector<8x128xbf16>
      %c1 = arith.constant 1 : index
      %c0_25 = arith.constant 0 : index
      %c0_26 = arith.constant 0 : index
      %28 = vector.load %arg4[%c1, %c0_25, %c0_26] : memref<4x128x128xbf16, #tpu.memory_space<vmem>>, vector<1x128x128xbf16>
      %29 = vector.shape_cast %28 : vector<1x128x128xbf16> to vector<128x128xbf16>
      %cst_27 = arith.constant dense<0.000000e+00> : vector<8x128xf32>
      %30 = tpu.matmul %27, %29, %cst_27 {dimension_numbers = #tpu.dot_dimension_numbers<[1], [0], [0], [1], [0, 0, 1, 1], [], []>} : vector<8x128xbf16>, vector<128x128xbf16>, vector<8x128xf32> -> vector<8x128xf32>
      %c1_28 = arith.constant 1 : index
      %c0_29 = arith.constant 0 : index
      %c0_30 = arith.constant 0 : index
      %31 = vector.load %arg5[%c1_28, %c0_29, %c0_30] : memref<4x1x128xf32, #tpu.memory_space<vmem>>, vector<1x1x128xf32>
      %32 = vector.shape_cast %31 : vector<1x1x128xf32> to vector<1x128xf32>
      %33 = vector.broadcast %32 : vector<1x128xf32> to vector<8x128xf32>
      %34 = arith.addf %30, %33 : vector<8x128xf32>
      %c0_31 = arith.constant 0 : index
      %c8_32 = arith.constant 8 : index
      %c0_33 = arith.constant 0 : index
      %35 = vector.load %arg6[%c0_31, %c8_32, %c0_33] : memref<1x72x128xf32, #tpu.memory_space<vmem>>, vector<1x8x128xf32>
      %36 = vector.shape_cast %35 : vector<1x8x128xf32> to vector<8x128xf32>
      %37 = vector.shape_cast %34 : vector<8x128xf32> to vector<1x8x128xf32>
      tpu.vector_store %arg6[%c0_31, %c8_32, %c0_33], %37 {strides = array<i32>} : memref<1x72x128xf32, #tpu.memory_space<vmem>>, vector<1x8x128xf32>,
      %c16 = arith.constant 16 : index
      %c0_34 = arith.constant 0 : index
      %38 = vector.load %arg7[%c16, %c0_34] : memref<72x128xf32, #tpu.memory_space<vmem>>, vector<16x128xf32>
      %39 = arith.truncf %38 : vector<16x128xf32> to vector<16x128xbf16>
      %c2 = arith.constant 2 : index
      %c0_35 = arith.constant 0 : index
      %c0_36 = arith.constant 0 : index
      %40 = vector.load %arg4[%c2, %c0_35, %c0_36] : memref<4x128x128xbf16, #tpu.memory_space<vmem>>, vector<1x128x128xbf16>
      %41 = vector.shape_cast %40 : vector<1x128x128xbf16> to vector<128x128xbf16>
      %cst_37 = arith.constant dense<0.000000e+00> : vector<16x128xf32>
      %42 = tpu.matmul %39, %41, %cst_37 {dimension_numbers = #tpu.dot_dimension_numbers<[1], [0], [0], [1], [0, 0, 1, 1], [], []>} : vector<16x128xbf16>, vector<128x128xbf16>, vector<16x128xf32> -> vector<16x128xf32>
      %c2_38 = arith.constant 2 : index
      %c0_39 = arith.constant 0 : index
      %c0_40 = arith.constant 0 : index
      %43 = vector.load %arg5[%c2_38, %c0_39, %c0_40] : memref<4x1x128xf32, #tpu.memory_space<vmem>>, vector<1x1x128xf32>
      %44 = vector.shape_cast %43 : vector<1x1x128xf32> to vector<1x128xf32>
      %45 = vector.broadcast %44 : vector<1x128xf32> to vector<16x128xf32>
      %46 = arith.addf %42, %45 : vector<16x128xf32>
      %c0_41 = arith.constant 0 : index
      %c16_42 = arith.constant 16 : index
      %c0_43 = arith.constant 0 : index
      %47 = vector.load %arg6[%c0_41, %c16_42, %c0_43] : memref<1x72x128xf32, #tpu.memory_space<vmem>>, vector<1x16x128xf32>
      %48 = vector.shape_cast %47 : vector<1x16x128xf32> to vector<16x128xf32>
      %49 = vector.shape_cast %46 : vector<16x128xf32> to vector<1x16x128xf32>
      tpu.vector_store %arg6[%c0_41, %c16_42, %c0_43], %49 {strides = array<i32>} : memref<1x72x128xf32, #tpu.memory_space<vmem>>, vector<1x16x128xf32>,
      %c32 = arith.constant 32 : index
      %c0_44 = arith.constant 0 : index
      %50 = vector.load %arg7[%c32, %c0_44] : memref<72x128xf32, #tpu.memory_space<vmem>>, vector<40x128xf32>
      %51 = arith.truncf %50 : vector<40x128xf32> to vector<40x128xbf16>
      %c3 = arith.constant 3 : index
      %c0_45 = arith.constant 0 : index
      %c0_46 = arith.constant 0 : index
      %52 = vector.load %arg4[%c3, %c0_45, %c0_46] : memref<4x128x128xbf16, #tpu.memory_space<vmem>>, vector<1x128x128xbf16>
      %53 = vector.shape_cast %52 : vector<1x128x128xbf16> to vector<128x128xbf16>
      %cst_47 = arith.constant dense<0.000000e+00> : vector<40x128xf32>
      %54 = tpu.matmul %51, %53, %cst_47 {dimension_numbers = #tpu.dot_dimension_numbers<[1], [0], [0], [1], [0, 0, 1, 1], [], []>} : vector<40x128xbf16>, vector<128x128xbf16>, vector<40x128xf32> -> vector<40x128xf32>
      %c3_48 = arith.constant 3 : index
      %c0_49 = arith.constant 0 : index
      %c0_50 = arith.constant 0 : index
      %55 = vector.load %arg5[%c3_48, %c0_49, %c0_50] : memref<4x1x128xf32, #tpu.memory_space<vmem>>, vector<1x1x128xf32>
      %56 = vector.shape_cast %55 : vector<1x1x128xf32> to vector<1x128xf32>
      %57 = vector.broadcast %56 : vector<1x128xf32> to vector<40x128xf32>
      %58 = arith.addf %54, %57 : vector<40x128xf32>
      %c0_51 = arith.constant 0 : index
      %c32_52 = arith.constant 32 : index
      %c0_53 = arith.constant 0 : index
      %59 = vector.load %arg6[%c0_51, %c32_52, %c0_53] : memref<1x72x128xf32, #tpu.memory_space<vmem>>, vector<1x40x128xf32>
      %60 = vector.shape_cast %59 : vector<1x40x128xf32> to vector<40x128xf32>
      %61 = vector.shape_cast %58 : vector<40x128xf32> to vector<1x40x128xf32>
      tpu.vector_store %arg6[%c0_51, %c32_52, %c0_53], %61 {strides = array<i32>} : memref<1x72x128xf32, #tpu.memory_space<vmem>>, vector<1x40x128xf32>,
    } else {
    }
    return
  }
  func.func @transform_0(%arg0: i32, %arg1: i32) -> (i32, i32, i32) {
    %c0_i32 = arith.constant 0 : i32
    %c0_i32_0 = arith.constant 0 : i32
    return %arg0, %arg1, %c0_i32 : i32, i32, i32
  }
  func.func @transform_1(%arg0: i32, %arg1: i32) -> (i32, i32, i32) {
    %c0_i32 = arith.constant 0 : i32
    %c0_i32_0 = arith.constant 0 : i32
    %c0_i32_1 = arith.constant 0 : i32
    return %arg1, %c0_i32, %c0_i32_0 : i32, i32, i32
  }
  func.func @transform_2(%arg0: i32, %arg1: i32) -> (i32, i32, i32) {
    %c0_i32 = arith.constant 0 : i32
    %c0_i32_0 = arith.constant 0 : i32
    %c0_i32_1 = arith.constant 0 : i32
    %c0_i32_2 = arith.constant 0 : i32
    return %c0_i32, %c0_i32_0, %c0_i32_1 : i32, i32, i32
  }
  func.func @transform_3(%arg0: i32, %arg1: i32) -> (i32, i32, i32) {
    %c0_i32 = arith.constant 0 : i32
    %c0_i32_0 = arith.constant 0 : i32
    %c0_i32_1 = arith.constant 0 : i32
    %c0_i32_2 = arith.constant 0 : i32
    return %c0_i32, %c0_i32_0, %c0_i32_1 : i32, i32, i32
  }
  func.func @transform_4(%arg0: i32, %arg1: i32) -> (i32, i32, i32) {
    %c0_i32 = arith.constant 0 : i32
    %c0_i32_0 = arith.constant 0 : i32
    %c0_i32_1 = arith.constant 0 : i32
    return %arg0, %c0_i32, %c0_i32_0 : i32, i32, i32
  }
}

</mosaic_0001>

<llo_original>
// kernel: tpu_custom_call.1
$region0: #{tpu_custom_call.1}
  #allocation0 [shape = 'u32[]', space=smem, size = 0x4, offset = 0x4, fixed_abs, tag = 'smem constant byte address 0x4 - core index']
  #allocation1 [shape = 'u32[72,128]{1,0:T(1,128)}', space=vmem, size = 0x9000, scoped, tag = 'internal scratch']
  #allocation2 [shape = 'f32[72,128]{1,0:T(8,128)}', space=vmem, size = 0x9000, scoped, tag = 'scratch operand']
  %s0 = inlined_call_operand.hbm [shape: bf16[2,256,128], index: 0, kind: input, shape index: {}]
  %s1 = inlined_call_operand.hbm [shape: bf16[1,72,256], index: 1, kind: input, shape index: {}]
  %s2 = inlined_call_operand.hbm [shape: bf16[4,128,128], index: 2, kind: input, shape index: {}]
  %s3 = inlined_call_operand.hbm [shape: f32[4,1,128], index: 3, kind: input, shape index: {}]
  %s4 = inlined_call_operand.hbm [shape: f32[2,72,128], index: 4, kind: output, shape index: {}]
  %s5 = sld [smem:[#allocation0]]
  $region73: #{tpu_custom_call.1} parent=0
    _
  %s7 = ssub.s32 1, %s5
  %s8 = scalar_select 0, %s7, %s5
  $region1: #{tpu_custom_call.1} parent=0
    #allocation3 [shape = 'u8[131072]{0}', space=vmem, size = 0x20000, scoped, tag = 'input window, operand 0']
    #allocation4 [shape = 's32[2]{0}', space=sflag, size = 0x8, scoped, tag = 'scoped memory for tpu_custom_call.1']
    #allocation5 [shape = 's32[2]{0}', space=sflag, size = 0x8, scoped, tag = 'scoped memory for tpu_custom_call.1']
    #allocation6 [shape = 'u8[36864]{0}', space=vmem, size = 0x9000, scoped, tag = 'input window, operand 1, single buffered']
    #allocation7 [shape = 's32[1]{0}', space=sflag, size = 0x4, scoped, tag = 'scoped memory for tpu_custom_call.1']
    #allocation8 [shape = 'u8[131072]{0}', space=vmem, size = 0x20000, scoped, tag = 'input window, operand 2, single buffered']
    #allocation9 [shape = 'u8[2048]{0}', space=vmem, size = 0x800, scoped, tag = 'input window, operand 3, single buffered']
    #allocation10 [shape = 's32[1]{0}', space=sflag, size = 0x4, scoped, tag = 'scoped memory for tpu_custom_call.1']
    #allocation11 [shape = 'u8[73728]{0}', space=vmem, size = 0x12000, scoped, tag = 'output window, operand 0']
    %9 = vsyncpa [#allocation4], 0
    %s10 = scalar_lea.sflag [#allocation4], 1
    %11 = vsyncpa %s10, 0
    %12 = vsyncpa [#allocation7], 0
    %13 = vsyncpa [#allocation10], 0
    %14 = vsyncpa [#allocation5], 0
    %s15 = scalar_lea.sflag [#allocation5], 1
    %16 = vsyncpa %s15, 0
    loop: start=0, step=1, limit=4
    $region2: #{tpu_custom_call.1} parent=1 // loop_pre_header
      _
    $region3: #{tpu_custom_call.1} parent=1 // loop_header
      %s18 = sphi 0, %s22
      %p19 = scmp.ge.s32.totalorder %s18, 4
      %s25 = sphi 0, %s37
      %s26 = sphi 0, %s33
      %s27 = sphi 0, %s25
      %s28 = sphi 0, %s26
      %s29 = sphi 0, %s27
      %s30 = sphi 0, %s28
      %s42 = sphi 0, %s44
      %s45 = sphi 0, %s42
      %s46 = sphi 0, %s45
      %s62 = sphi 0, %s46
      %s68 = sphi 0, %s70
      %s71 = sphi 0, %s68
      %s72 = sphi 0, %s71
      %s88 = sphi 0, %s72
      %s92 = sphi 0, %s92
      %s94 = sphi 0, %s92
      %s95 = sphi 0, %s94
      %s109 = sphi 0, %s95
      %s113 = sphi 0, %s113
      %s115 = sphi 0, %s113
      %s116 = sphi 0, %s115
      %s130 = sphi 0, %s116
      %s136 = sphi 0, %s138
      %s139 = sphi 0, %s136
      %s140 = sphi 0, %s139
      %s156 = sphi 0, %s140
    $region4: #{tpu_custom_call.1} parent=1 // loop_header_branch
      %21 = sbr.rel (%p19) target = $region8
    $region5: #{tpu_custom_call.1} parent=1 // loop_body
      %s23 = ssub.s32 %s18, 1
      %s24 = ssub.s32 %s18, 2
      %s31 = sadd.s32 1, %s26
      %p32 = scmp.ge.s32.totalorder %s31, 1
      %s33 = scalar_select %p32, 0, %s31
      %s34 = sadd.s32 1, %s25
      %s35 = scalar_select %p32, %s34, %s25
      %p36 = scmp.ge.s32.totalorder %s35, 2
      %s37 = scalar_select %p36, 0, %s35
      %s38 = ssub.s32 %s25, %s37
      %s39 = ssub.s32 %s26, %s33
      %s40 = sor.u32 %s38, %s39
      %p41 = scmp.eq.s32.totalorder %s40, 0
      %s43 = sadd.s32 %s42, 1
      %s44 = scalar_select %p41, %s42, %s43
      %p47 = pneg %p41
      %p48 = scmp.eq.s32.totalorder %s18, 1
      %p49 = por %p47, %p48
      %p50 = scmp.ne.s32.totalorder %s42, %s45
      %p51 = scmp.eq.s32.totalorder %s18, 0
      %p52 = por %p50, %p51
      %p53 = scmp.ne.s32.totalorder %s42, %s45
      %p54 = scmp.eq.s32.totalorder %s23, 1
      %p55 = por %p53, %p54
      %p56 = scmp.ne.s32.totalorder %s45, %s46
      %p57 = scmp.eq.s32.totalorder %s23, 0
      %p58 = por %p56, %p57
      %p59 = scmp.ne.s32.totalorder %s45, %s46
      %p60 = scmp.eq.s32.totalorder %s24, 1
      %p61 = por %p59, %p60
      %p63 = scmp.ne.s32.totalorder %s46, %s62
      %p64 = scmp.eq.s32.totalorder %s24, 0
      %p65 = por %p63, %p64
      %s66 = ssub.s32 %s26, %s33
      %p67 = scmp.eq.s32.totalorder %s66, 0
      %s69 = sadd.s32 %s68, 1
      %s70 = scalar_select %p67, %s68, %s69
      %p73 = pneg %p67
      %p74 = scmp.eq.s32.totalorder %s18, 1
      %p75 = por %p73, %p74
      %p76 = scmp.ne.s32.totalorder %s68, %s71
      %p77 = scmp.eq.s32.totalorder %s18, 0
      %p78 = por %p76, %p77
      %p79 = scmp.ne.s32.totalorder %s68, %s71
      %p80 = scmp.eq.s32.totalorder %s23, 1
      %p81 = por %p79, %p80
      %p82 = scmp.ne.s32.totalorder %s71, %s72
      %p83 = scmp.eq.s32.totalorder %s23, 0
      %p84 = por %p82, %p83
      %p85 = scmp.ne.s32.totalorder %s71, %s72
      %p86 = scmp.eq.s32.totalorder %s24, 1
      %p87 = por %p85, %p86
      %p89 = scmp.ne.s32.totalorder %s72, %s88
      %p90 = scmp.eq.s32.totalorder %s24, 0
      %p91 = por %p89, %p90
      %s93 = sadd.s32 %s92, 1
      %p96 = scmp.eq.s32.totalorder %s18, 1
      %p97 = scmp.ne.s32.totalorder %s92, %s94
      %p98 = scmp.eq.s32.totalorder %s18, 0
      %p99 = por %p97, %p98
      %p100 = scmp.ne.s32.totalorder %s92, %s94
      %p101 = scmp.eq.s32.totalorder %s23, 1
      %p102 = por %p100, %p101
      %p103 = scmp.ne.s32.totalorder %s94, %s95
      %p104 = scmp.eq.s32.totalorder %s23, 0
      %p105 = por %p103, %p104
      %p106 = scmp.ne.s32.totalorder %s94, %s95
      %p107 = scmp.eq.s32.totalorder %s24, 1
      %p108 = por %p106, %p107
      %p110 = scmp.ne.s32.totalorder %s95, %s109
      %p111 = scmp.eq.s32.totalorder %s24, 0
      %p112 = por %p110, %p111
      %s114 = sadd.s32 %s113, 1
      %p117 = scmp.eq.s32.totalorder %s18, 1
      %p118 = scmp.ne.s32.totalorder %s113, %s115
      %p119 = scmp.eq.s32.totalorder %s18, 0
      %p120 = por %p118, %p119
      %p121 = scmp.ne.s32.totalorder %s113, %s115
      %p122 = scmp.eq.s32.totalorder %s23, 1
      %p123 = por %p121, %p122
      %p124 = scmp.ne.s32.totalorder %s115, %s116
      %p125 = scmp.eq.s32.totalorder %s23, 0
      %p126 = por %p124, %p125
      %p127 = scmp.ne.s32.totalorder %s115, %s116
      %p128 = scmp.eq.s32.totalorder %s24, 1
      %p129 = por %p127, %p128
      %p131 = scmp.ne.s32.totalorder %s116, %s130
      %p132 = scmp.eq.s32.totalorder %s24, 0
      %p133 = por %p131, %p132
      %s134 = ssub.s32 %s25, %s37
      %p135 = scmp.eq.s32.totalorder %s134, 0
      %s137 = sadd.s32 %s136, 1
      %s138 = scalar_select %p135, %s136, %s137
      %p141 = pneg %p135
      %p142 = scmp.eq.s32.totalorder %s18, 1
      %p143 = por %p141, %p142
      %p144 = scmp.ne.s32.totalorder %s136, %s139
      %p145 = scmp.eq.s32.totalorder %s18, 0
      %p146 = por %p144, %p145
      %p147 = scmp.ne.s32.totalorder %s136, %s139
      %p148 = scmp.eq.s32.totalorder %s23, 1
      %p149 = por %p147, %p148
      %p150 = scmp.ne.s32.totalorder %s139, %s140
      %p151 = scmp.eq.s32.totalorder %s23, 0
      %p152 = por %p150, %p151
      %p153 = scmp.ne.s32.totalorder %s139, %s140
      %p154 = scmp.eq.s32.totalorder %s24, 1
      %p155 = por %p153, %p154
      %p157 = scmp.ne.s32.totalorder %s140, %s156
      %p158 = scmp.eq.s32.totalorder %s24, 0
      %p159 = por %p157, %p158
      %p160 = scmp.le.s32.totalorder 1, %s18
      %p161 = scmp.lt.s32.totalorder %s18, 3
      %p162 = pnand %p160, %p161
      %p163 = pneg %p162
      // Predicated region
      $region9: #{tpu_custom_call.1} parent=5 // pred_check
        _
      $region10: #{tpu_custom_call.1} parent=5 // pred_check_branch
        %165 = sbr.rel (%p162) target = $region12
      $region11: #{tpu_custom_call.1} parent=5 // pred_region
        %s166 = ssub.s32 %s18, 1
        // Predicated region
        $region13: #{tpu_custom_call.1} parent=11 // pred_check
          %p167 = pneg %p84
        $region14: #{tpu_custom_call.1} parent=11 // pred_check_branch
          %169 = sbr.rel (%p167) target = $region16
        $region15: #{tpu_custom_call.1} parent=11 // pred_region
          %171 = vsyncadd [#allocation7], 0
          %s172 = smul.addr %s28, 18
          %s173 = smul.addr %s172, 4
          %s174 = scalar_lea.hbm %s1, %s173
          %s175 = sshll.u32 %s174, 4
          %s176 = int_to_ptr.hbm [resolvable:$true] %s175
          %s177 = sshll.u32 [#allocation6], 4
          %s178 = int_to_ptr.vmem [resolvable:$true] %s177
          %183 = dma.hbm_to_vmem [thread:$0]  %s176, 1152, %s178, [#allocation7], 128, 128, 8
        $region16: #{tpu_custom_call.1} parent=11 // pred_fallthru
          _
        // Predicated region
        $region17: #{tpu_custom_call.1} parent=11 // pred_check
          %p184 = pneg %p105
        $region18: #{tpu_custom_call.1} parent=11 // pred_check_branch
          %186 = sbr.rel (%p184) target = $region20
        $region19: #{tpu_custom_call.1} parent=11 // pred_region
          %188 = vsyncadd [#allocation7], 0
          %s189 = sshll.u32 %s2, 4
          %s190 = int_to_ptr.hbm [resolvable:$true] %s189
          %s191 = sshll.u32 [#allocation8], 4
          %s192 = int_to_ptr.vmem [resolvable:$true] %s191
          %197 = dma.hbm_to_vmem [thread:$0]  %s190, 4096, %s192, [#allocation7], 64, 64, 4
        $region20: #{tpu_custom_call.1} parent=11 // pred_fallthru
          _
        // Predicated region
        $region21: #{tpu_custom_call.1} parent=11 // pred_check
          %p198 = pneg %p126
        $region22: #{tpu_custom_call.1} parent=11 // pred_check_branch
          %200 = sbr.rel (%p198) target = $region24
        $region23: #{tpu_custom_call.1} parent=11 // pred_region
          %202 = vsyncadd [#allocation10], 0
          %s203 = sshll.u32 %s3, 4
          %s204 = int_to_ptr.hbm [resolvable:$true] %s203
          %s205 = sshll.u32 [#allocation9], 4
          %s206 = int_to_ptr.vmem [resolvable:$true] %s205
          %211 = dma.hbm_to_vmem [thread:$0]  %s204, 64, %s206, [#allocation10], 16, 16, 1
        $region24: #{tpu_custom_call.1} parent=11 // pred_fallthru
          _
      $region12: #{tpu_custom_call.1} parent=5 // pred_fallthru
        _
      %p212 = scmp.lt.s32.totalorder %s18, 2
      // Predicated region
      $region25: #{tpu_custom_call.1} parent=5 // pred_check
        %p213 = pneg %p212
      $region26: #{tpu_custom_call.1} parent=5 // pred_check_branch
        %215 = sbr.rel (%p213) target = $region28
      $region27: #{tpu_custom_call.1} parent=5 // pred_region
        // Predicated region
        $region29: #{tpu_custom_call.1} parent=27 // pred_check
          %p216 = pneg %p52
        $region30: #{tpu_custom_call.1} parent=27 // pred_check_branch
          %218 = sbr.rel (%p216) target = $region32
        $region31: #{tpu_custom_call.1} parent=27 // pred_region
          %s219 = sand.u32 %s42, 1
          %s220 = scalar_lea.sflag [#allocation4], %s219
          %s221 = sand.u32 %s42, 1
          %s222 = smul.addr %s221, 128
          %s223 = scalar_lea.vmem [#allocation3], %s222
          %s224 = smul.u32 32, %s26
          %226 = vsyncadd %s220, 0
          %s227 = smul.addr %s25, 32
          %s228 = sadd.s32 %s224, %s227
          %s229 = smul.addr %s228, 4
          %s230 = scalar_lea.hbm %s0, %s229
          %s231 = sshll.u32 %s230, 4
          %s232 = int_to_ptr.hbm [resolvable:$true] %s231
          %s233 = sshll.u32 %s223, 4
          %s234 = int_to_ptr.vmem [resolvable:$true] %s233
          %239 = dma.hbm_to_vmem [thread:$0]  %s232, 2048, %s234, %s220, 64, 64, 4
        $region32: #{tpu_custom_call.1} parent=27 // pred_fallthru
          _
      $region28: #{tpu_custom_call.1} parent=5 // pred_fallthru
        _
      %p240 = scmp.le.s32.totalorder 1, %s18
      %p241 = scmp.lt.s32.totalorder %s18, 3
      %p242 = pnand %p240, %p241
      %p243 = pneg %p242
      // Predicated region
      $region33: #{tpu_custom_call.1} parent=5 // pred_check
        _
      $region34: #{tpu_custom_call.1} parent=5 // pred_check_branch
        %245 = sbr.rel (%p242) target = $region36
      $region35: #{tpu_custom_call.1} parent=5 // pred_region
        %s246 = ssub.s32 %s18, 1
        %s247 = sand.u32 %s45, 1
        %s248 = scalar_lea.sflag [#allocation4], %s247
        %s249 = sand.u32 %s45, 1
        %s250 = smul.addr %s249, 128
        %s251 = scalar_lea.vmem [#allocation3], %s250
        // Predicated region
        $region37: #{tpu_custom_call.1} parent=35 // pred_check
          %p252 = pneg %p58
        $region38: #{tpu_custom_call.1} parent=35 // pred_check_branch
          %254 = sbr.rel (%p252) target = $region40
        $region39: #{tpu_custom_call.1} parent=35 // pred_region
          %256 = dma.done %s248, 2048
        $region40: #{tpu_custom_call.1} parent=35 // pred_fallthru
          _
        // Predicated region
        $region41: #{tpu_custom_call.1} parent=35 // pred_check
          %p257 = pneg %p84
        $region42: #{tpu_custom_call.1} parent=35 // pred_check_branch
          %259 = sbr.rel (%p257) target = $region44
        $region43: #{tpu_custom_call.1} parent=35 // pred_region
          %261 = dma.done [#allocation7], 1152
        $region44: #{tpu_custom_call.1} parent=35 // pred_fallthru
          _
        // Predicated region
        $region45: #{tpu_custom_call.1} parent=35 // pred_check
          %p262 = pneg %p105
        $region46: #{tpu_custom_call.1} parent=35 // pred_check_branch
          %264 = sbr.rel (%p262) target = $region48
        $region47: #{tpu_custom_call.1} parent=35 // pred_region
          %266 = dma.done [#allocation7], 4096
        $region48: #{tpu_custom_call.1} parent=35 // pred_fallthru
          _
        // Predicated region
        $region49: #{tpu_custom_call.1} parent=35 // pred_check
          %p267 = pneg %p126
        $region50: #{tpu_custom_call.1} parent=35 // pred_check_branch
          %269 = sbr.rel (%p267) target = $region52
        $region51: #{tpu_custom_call.1} parent=35 // pred_region
          %271 = dma.done [#allocation10], 64
        $region52: #{tpu_custom_call.1} parent=35 // pred_fallthru
          _
        %s272 = sand.u32 %s45, 1
        %s273 = scalar_lea.sflag [#allocation4], %s272
        %s274 = sand.u32 %s45, 1
        %s275 = smul.addr %s274, 128
        %s276 = scalar_lea.vmem [#allocation3], %s275
        %p277 = pneg %p58
        %p278 = pneg %p55
        %p279 = pneg %p84
        %p280 = pneg %p81
        %p281 = pneg %p105
        %p282 = pneg %p102
        %p283 = pneg %p126
        %p284 = pneg %p123
        %p285 = pneg %p152
        %p286 = pneg %p149
        %s287 = sand.u32 %s139, 1
        %s288 = scalar_lea.sflag [#allocation5], %s287
        %s289 = sand.u32 %s139, 1
        %s290 = smul.addr %s289, 72
        %s291 = scalar_lea.vmem [#allocation11], %s290
        %s292 = smul.u32 32, %s28
        %p293 = scmp.eq.s32.totalorder %s28, 0
        // Predicated region
        $region53: #{tpu_custom_call.1} parent=35 // pred_check
          %p294 = pneg %p293
        $region54: #{tpu_custom_call.1} parent=35 // pred_check_branch
          %296 = sbr.rel (%p294) target = $region56
        $region55: #{tpu_custom_call.1} parent=35 // pred_region
          %297 = vst [vmem:[#allocation2] sm:$0xff] 0.0
          %298 = vst [vmem:[#allocation2 + $0x8] sm:$0xff] 0.0
          %299 = vst [vmem:[#allocation2 + $0x10] sm:$0xff] 0.0
          %300 = vst [vmem:[#allocation2 + $0x18] sm:$0xff] 0.0
          %301 = vst [vmem:[#allocation2 + $0x20] sm:$0xff] 0.0
          %302 = vst [vmem:[#allocation2 + $0x28] sm:$0xff] 0.0
          %303 = vst [vmem:[#allocation2 + $0x30] sm:$0xff] 0.0
          %304 = vst [vmem:[#allocation2 + $0x38] sm:$0xff] 0.0
          %305 = vst [vmem:[#allocation2 + $0x40] sm:$0xff] 0.0
        $region56: #{tpu_custom_call.1} parent=35 // pred_fallthru
          _
        %v306 = vld [vmem:[#allocation2] sm:$0xff]
        %v307 = vld [vmem:[#allocation2 + $0x8] sm:$0xff]
        %v308 = vld [vmem:[#allocation2 + $0x10] sm:$0xff]
        %v309 = vld [vmem:[#allocation2 + $0x18] sm:$0xff]
        %v310 = vld [vmem:[#allocation2 + $0x20] sm:$0xff]
        %v311 = vld [vmem:[#allocation2 + $0x28] sm:$0xff]
        %v312 = vld [vmem:[#allocation2 + $0x30] sm:$0xff]
        %v313 = vld [vmem:[#allocation2 + $0x38] sm:$0xff]
        %v314 = vld [vmem:[#allocation2 + $0x40] sm:$0xff]
        %v315 = vld [vmem:[#allocation6] sm:$0xff]
        %v316 = vld [vmem:[#allocation6 + $0x8] sm:$0xff]
        %v317 = vld [vmem:[#allocation6 + $0x10] sm:$0xff]
        %v318 = vld [vmem:[#allocation6 + $0x18] sm:$0xff]
        %v319 = vld [vmem:[#allocation6 + $0x20] sm:$0xff]
        %v320 = vld [vmem:[#allocation6 + $0x28] sm:$0xff]
        %v321 = vld [vmem:[#allocation6 + $0x30] sm:$0xff]
        %v322 = vld [vmem:[#allocation6 + $0x38] sm:$0xff]
        %v323 = vld [vmem:[#allocation6 + $0x40] sm:$0xff]
        %v324 = vld [vmem:[%s251] sm:$0xf]
        %v325 = vld [vmem:[%s251 + $0x4] sm:$0xf]
        %v326 = vld [vmem:[%s251 + $0x8] sm:$0xf]
        %v327 = vld [vmem:[%s251 + $0xc] sm:$0xf]
        %v328 = vld [vmem:[%s251 + $0x10] sm:$0xf]
        %v329 = vld [vmem:[%s251 + $0x14] sm:$0xf]
        %v330 = vld [vmem:[%s251 + $0x18] sm:$0xf]
        %v331 = vld [vmem:[%s251 + $0x1c] sm:$0xf]
        %v332 = vld [vmem:[%s251 + $0x20] sm:$0xf]
        %v333 = vld [vmem:[%s251 + $0x24] sm:$0xf]
        %v334 = vld [vmem:[%s251 + $0x28] sm:$0xf]
        %v335 = vld [vmem:[%s251 + $0x2c] sm:$0xf]
        %v336 = vld [vmem:[%s251 + $0x30] sm:$0xf]
        %v337 = vld [vmem:[%s251 + $0x34] sm:$0xf]
        %v338 = vld [vmem:[%s251 + $0x38] sm:$0xf]
        %v339 = vld [vmem:[%s251 + $0x3c] sm:$0xf]
        %v340 = vld [vmem:[%s251 + $0x40] sm:$0xf]
        %v341 = vld [vmem:[%s251 + $0x44] sm:$0xf]
        %v342 = vld [vmem:[%s251 + $0x48] sm:$0xf]
        %v343 = vld [vmem:[%s251 + $0x4c] sm:$0xf]
        %v344 = vld [vmem:[%s251 + $0x50] sm:$0xf]
        %v345 = vld [vmem:[%s251 + $0x54] sm:$0xf]
        %v346 = vld [vmem:[%s251 + $0x58] sm:$0xf]
        %v347 = vld [vmem:[%s251 + $0x5c] sm:$0xf]
        %v348 = vld [vmem:[%s251 + $0x60] sm:$0xf]
        %v349 = vld [vmem:[%s251 + $0x64] sm:$0xf]
        %v350 = vld [vmem:[%s251 + $0x68] sm:$0xf]
        %v351 = vld [vmem:[%s251 + $0x6c] sm:$0xf]
        %v352 = vld [vmem:[%s251 + $0x70] sm:$0xf]
        %v353 = vld [vmem:[%s251 + $0x74] sm:$0xf]
        %v354 = vld [vmem:[%s251 + $0x78] sm:$0xf]
        %v355 = vld [vmem:[%s251 + $0x7c] sm:$0xf]
        %v365 = vunpack.c.l.b16 %v315
        %v366 = vunpack.c.h.b16 %v315
        %v367 = vunpack.c.l.b16 %v316
        %v368 = vunpack.c.h.b16 %v316
        %v369 = vunpack.c.l.b16 %v317
        %v370 = vunpack.c.h.b16 %v317
        %v371 = vunpack.c.l.b16 %v318
        %v372 = vunpack.c.h.b16 %v318
        %v373 = vunpack.c.l.b16 %v319
        %v374 = vunpack.c.h.b16 %v319
        %v375 = vunpack.c.l.b16 %v320
        %v376 = vunpack.c.h.b16 %v320
        %v377 = vunpack.c.l.b16 %v321
        %v378 = vunpack.c.h.b16 %v321
        %v379 = vunpack.c.l.b16 %v322
        %v380 = vunpack.c.h.b16 %v322
        %v381 = vunpack.c.l.b16 %v323
        %v382 = vunpack.c.h.b16 %v323
        %v383 = vpack.c.b16 %v367, %v365
        %v384 = vpack.c.b16 %v368, %v366
        %v385 = vpack.c.b16 %v371, %v369
        %v386 = vpack.c.b16 %v372, %v370
        %v387 = vpack.c.b16 %v375, %v373
        %v388 = vpack.c.b16 %v376, %v374
        %v389 = vpack.c.b16 %v379, %v377
        %v390 = vpack.c.b16 %v380, %v378
        %v391 = vpack.c.b16 %v381, %v381
        %v392 = vpack.c.b16 %v382, %v382
        %v435 = vunpack.c.l.b16 %v324
        %v436 = vunpack.c.l.b16 %v325
        %v437 = vunpack.c.l.b16 %v326
        %v438 = vunpack.c.l.b16 %v327
        %v439 = vunpack.c.l.b16 %v328
        %v440 = vunpack.c.l.b16 %v329
        %v441 = vunpack.c.l.b16 %v330
        %v442 = vunpack.c.l.b16 %v331
        %v443 = vunpack.c.l.b16 %v332
        %v444 = vunpack.c.l.b16 %v333
        %v445 = vunpack.c.l.b16 %v334
        %v446 = vunpack.c.l.b16 %v335
        %v447 = vunpack.c.l.b16 %v336
        %v448 = vunpack.c.l.b16 %v337
        %v449 = vunpack.c.l.b16 %v338
        %v450 = vunpack.c.l.b16 %v339
        %v451 = vunpack.c.l.b16 %v340
        %v452 = vunpack.c.l.b16 %v341
        %v453 = vunpack.c.l.b16 %v342
        %v454 = vunpack.c.l.b16 %v343
        %v455 = vunpack.c.l.b16 %v344
        %v456 = vunpack.c.l.b16 %v345
        %v457 = vunpack.c.l.b16 %v346
        %v458 = vunpack.c.l.b16 %v347
        %v459 = vunpack.c.l.b16 %v348
        %v460 = vunpack.c.l.b16 %v349
        %v461 = vunpack.c.l.b16 %v350
        %v462 = vunpack.c.l.b16 %v351
        %v463 = vunpack.c.l.b16 %v352
        %v464 = vunpack.c.l.b16 %v353
        %v465 = vunpack.c.l.b16 %v354
        %v466 = vunpack.c.l.b16 %v355
        %v467 = vpack.c.b16 %v436, %v435
        %v468 = vpack.c.b16 %v438, %v437
        %v469 = vpack.c.b16 %v440, %v439
        %v470 = vpack.c.b16 %v442, %v441
        %v471 = vpack.c.b16 %v444, %v443
        %v472 = vpack.c.b16 %v446, %v445
        %v473 = vpack.c.b16 %v448, %v447
        %v474 = vpack.c.b16 %v450, %v449
        %v475 = vpack.c.b16 %v452, %v451
        %v476 = vpack.c.b16 %v454, %v453
        %v477 = vpack.c.b16 %v456, %v455
        %v478 = vpack.c.b16 %v458, %v457
        %v479 = vpack.c.b16 %v460, %v459
        %v480 = vpack.c.b16 %v462, %v461
        %v481 = vpack.c.b16 %v464, %v463
        %v482 = vpack.c.b16 %v466, %v465
        %499 = vmatpush.bf16.msra.mxu0 %v474
        %500 = vmatpush.bf16.msra.mxu0 %v473
        %501 = vmatpush.bf16.msra.mxu0 %v472
        %502 = vmatpush.bf16.msra.mxu0 %v471
        %503 = vmatpush.bf16.msra.mxu0 %v470
        %504 = vmatpush.bf16.msra.mxu0 %v469
        %505 = vmatpush.bf16.msra.mxu0 %v468
        %506 = vmatpush.bf16.msra.mxu0 %v467
        %507 = vmatmul.bf16.gmra.mxu0 %v383
        %v508 = vpop.f32.mrf.mxu0
        %v509 = vadd.f32 0.0, %v508
        %v510 = vpop.f32.mrf.mxu0
        %v511 = vadd.f32 0.0, %v510
        %512 = vmatmul.bf16.gmra.mxu0 %v385
        %v513 = vpop.f32.mrf.mxu0
        %v514 = vadd.f32 0.0, %v513
        %v515 = vpop.f32.mrf.mxu0
        %v516 = vadd.f32 0.0, %v515
        %517 = vmatmul.bf16.gmra.mxu0 %v387
        %v518 = vpop.f32.mrf.mxu0
        %v519 = vadd.f32 0.0, %v518
        %v520 = vpop.f32.mrf.mxu0
        %v521 = vadd.f32 0.0, %v520
        %522 = vmatmul.bf16.gmra.mxu0 %v389
        %v523 = vpop.f32.mrf.mxu0
        %v524 = vadd.f32 0.0, %v523
        %v525 = vpop.f32.mrf.mxu0
        %v526 = vadd.f32 0.0, %v525
        %527 = vmatmul.bf16.gmra.mxu0 %v391
        %v528 = vpop.f32.mrf.mxu0
        %v529 = vadd.f32 0.0, %v528
        %v530 = vpop.f32.mrf.mxu0
        %531 = vdwg.mxu0
        %532 = vmatpush.bf16.msra.mxu0 %v482
        %533 = vmatpush.bf16.msra.mxu0 %v481
        %534 = vmatpush.bf16.msra.mxu0 %v480
        %535 = vmatpush.bf16.msra.mxu0 %v479
        %536 = vmatpush.bf16.msra.mxu0 %v478
        %537 = vmatpush.bf16.msra.mxu0 %v477
        %538 = vmatpush.bf16.msra.mxu0 %v476
        %539 = vmatpush.bf16.msra.mxu0 %v475
        %540 = vmatmul.bf16.gmra.mxu0 %v384
        %v541 = vpop.f32.mrf.mxu0
        %v542 = vadd.f32 %v509, %v541
        %v543 = vpop.f32.mrf.mxu0
        %v544 = vadd.f32 %v511, %v543
        %545 = vmatmul.bf16.gmra.mxu0 %v386
        %v546 = vpop.f32.mrf.mxu0
        %v547 = vadd.f32 %v514, %v546
        %v548 = vpop.f32.mrf.mxu0
        %v549 = vadd.f32 %v516, %v548
        %550 = vmatmul.bf16.gmra.mxu0 %v388
        %v551 = vpop.f32.mrf.mxu0
        %v552 = vadd.f32 %v519, %v551
        %v553 = vpop.f32.mrf.mxu0
        %v554 = vadd.f32 %v521, %v553
        %555 = vmatmul.bf16.gmra.mxu0 %v390
        %v556 = vpop.f32.mrf.mxu0
        %v557 = vadd.f32 %v524, %v556
        %v558 = vpop.f32.mrf.mxu0
        %v559 = vadd.f32 %v526, %v558
        %560 = vmatmul.bf16.gmra.mxu0 %v392
        %v561 = vpop.f32.mrf.mxu0
        %v562 = vadd.f32 %v529, %v561
        %v563 = vpop.f32.mrf.mxu0
        %564 = vdwg.mxu0
        %v565 = vadd.f32 %v306, %v542
        %v566 = vadd.f32 %v307, %v544
        %v567 = vadd.f32 %v308, %v547
        %v568 = vadd.f32 %v309, %v549
        %v569 = vadd.f32 %v310, %v552
        %v570 = vadd.f32 %v311, %v554
        %v571 = vadd.f32 %v312, %v557
        %v572 = vadd.f32 %v313, %v559
        %v573 = vadd.f32 %v314, %v562
        %574 = vst [vmem:[#allocation2] sm:$0xff] %v565
        %575 = vst [vmem:[#allocation2 + $0x8] sm:$0xff] %v566
        %576 = vst [vmem:[#allocation2 + $0x10] sm:$0xff] %v567
        %577 = vst [vmem:[#allocation2 + $0x18] sm:$0xff] %v568
        %578 = vst [vmem:[#allocation2 + $0x20] sm:$0xff] %v569
        %579 = vst [vmem:[#allocation2 + $0x28] sm:$0xff] %v570
        %580 = vst [vmem:[#allocation2 + $0x30] sm:$0xff] %v571
        %581 = vst [vmem:[#allocation2 + $0x38] sm:$0xff] %v572
        %582 = vst [vmem:[#allocation2 + $0x40] sm:$0xff] %v573
        // Predicated region
        $region57: #{tpu_custom_call.1} parent=35 // pred_check
          %p583 = pneg %p293
        $region58: #{tpu_custom_call.1} parent=35 // pred_check_branch
          %585 = sbr.rel (%p583) target = $region60
        $region59: #{tpu_custom_call.1} parent=35 // pred_region
          %v586 = vld [vmem:[#allocation2] sm:$0xff]
          %v587 = vpack.c.bf16 %v586, %v586
          %v588 = vld [vmem:[#allocation8] sm:$0xf]
          %v589 = vld [vmem:[#allocation8 + $0x4] sm:$0xf]
          %v590 = vld [vmem:[#allocation8 + $0x8] sm:$0xf]
          %v591 = vld [vmem:[#allocation8 + $0xc] sm:$0xf]
          %v592 = vld [vmem:[#allocation8 + $0x10] sm:$0xf]
          %v593 = vld [vmem:[#allocation8 + $0x14] sm:$0xf]
          %v594 = vld [vmem:[#allocation8 + $0x18] sm:$0xf]
          %v595 = vld [vmem:[#allocation8 + $0x1c] sm:$0xf]
          %v596 = vld [vmem:[#allocation8 + $0x20] sm:$0xf]
          %v597 = vld [vmem:[#allocation8 + $0x24] sm:$0xf]
          %v598 = vld [vmem:[#allocation8 + $0x28] sm:$0xf]
          %v599 = vld [vmem:[#allocation8 + $0x2c] sm:$0xf]
          %v600 = vld [vmem:[#allocation8 + $0x30] sm:$0xf]
          %v601 = vld [vmem:[#allocation8 + $0x34] sm:$0xf]
          %v602 = vld [vmem:[#allocation8 + $0x38] sm:$0xf]
          %v603 = vld [vmem:[#allocation8 + $0x3c] sm:$0xf]
          %v604 = vld [vmem:[#allocation9] sm:$0x1]
          %v606 = vperm.slane %v604, 0
          %v624 = vunpack.c.l.b16 %v588
          %v625 = vunpack.c.l.b16 %v589
          %v626 = vunpack.c.l.b16 %v590
          %v627 = vunpack.c.l.b16 %v591
          %v628 = vunpack.c.l.b16 %v592
          %v629 = vunpack.c.l.b16 %v593
          %v630 = vunpack.c.l.b16 %v594
          %v631 = vunpack.c.l.b16 %v595
          %v632 = vunpack.c.l.b16 %v596
          %v633 = vunpack.c.l.b16 %v597
          %v634 = vunpack.c.l.b16 %v598
          %v635 = vunpack.c.l.b16 %v599
          %v636 = vunpack.c.l.b16 %v600
          %v637 = vunpack.c.l.b16 %v601
          %v638 = vunpack.c.l.b16 %v602
          %v639 = vunpack.c.l.b16 %v603
          %v640 = vpack.c.b16 %v625, %v624
          %v641 = vpack.c.b16 %v627, %v626
          %v642 = vpack.c.b16 %v629, %v628
          %v643 = vpack.c.b16 %v631, %v630
          %v644 = vpack.c.b16 %v633, %v632
          %v645 = vpack.c.b16 %v635, %v634
          %v646 = vpack.c.b16 %v637, %v636
          %v647 = vpack.c.b16 %v639, %v638
          %656 = vmatpush.bf16.msra.mxu0 %v647
          %657 = vmatpush.bf16.msra.mxu0 %v646
          %658 = vmatpush.bf16.msra.mxu0 %v645
          %659 = vmatpush.bf16.msra.mxu0 %v644
          %660 = vmatpush.bf16.msra.mxu0 %v643
          %661 = vmatpush.bf16.msra.mxu0 %v642
          %662 = vmatpush.bf16.msra.mxu0 %v641
          %663 = vmatpush.bf16.msra.mxu0 %v640
          %664 = vmatmul.bf16.gmra.mxu0 %v587
          %v665 = vpop.f32.mrf.mxu0
          %v666 = vadd.f32 %v606, %v665
          %v667 = vpop.f32.mrf.mxu0
          %668 = vdwg.mxu0
          %669 = vst [vmem:[%s291] sm:$0xff] %v666
          %v670 = vld [vmem:[#allocation2 + $0x8] sm:$0xff]
          %v671 = vpack.c.bf16 %v670, %v670
          %s672 = scalar_lea.vmem [#allocation8], 64
          %v673 = vld [vmem:[%s672] sm:$0xf]
          %v674 = vld [vmem:[%s672 + $0x4] sm:$0xf]
          %v675 = vld [vmem:[%s672 + $0x8] sm:$0xf]
          %v676 = vld [vmem:[%s672 + $0xc] sm:$0xf]
          %v677 = vld [vmem:[%s672 + $0x10] sm:$0xf]
          %v678 = vld [vmem:[%s672 + $0x14] sm:$0xf]
          %v679 = vld [vmem:[%s672 + $0x18] sm:$0xf]
          %v680 = vld [vmem:[%s672 + $0x1c] sm:$0xf]
          %v681 = vld [vmem:[%s672 + $0x20] sm:$0xf]
          %v682 = vld [vmem:[%s672 + $0x24] sm:$0xf]
          %v683 = vld [vmem:[%s672 + $0x28] sm:$0xf]
          %v684 = vld [vmem:[%s672 + $0x2c] sm:$0xf]
          %v685 = vld [vmem:[%s672 + $0x30] sm:$0xf]
          %v686 = vld [vmem:[%s672 + $0x34] sm:$0xf]
          %v687 = vld [vmem:[%s672 + $0x38] sm:$0xf]
          %v688 = vld [vmem:[%s672 + $0x3c] sm:$0xf]
          %s689 = scalar_lea.vmem [#allocation9], 1
          %v690 = vld [vmem:[%s689] sm:$0x1]
          %v692 = vperm.slane %v690, 0
          %v710 = vunpack.c.l.b16 %v673
          %v711 = vunpack.c.l.b16 %v674
          %v712 = vunpack.c.l.b16 %v675
          %v713 = vunpack.c.l.b16 %v676
          %v714 = vunpack.c.l.b16 %v677
          %v715 = vunpack.c.l.b16 %v678
          %v716 = vunpack.c.l.b16 %v679
          %v717 = vunpack.c.l.b16 %v680
          %v718 = vunpack.c.l.b16 %v681
          %v719 = vunpack.c.l.b16 %v682
          %v720 = vunpack.c.l.b16 %v683
          %v721 = vunpack.c.l.b16 %v684
          %v722 = vunpack.c.l.b16 %v685
          %v723 = vunpack.c.l.b16 %v686
          %v724 = vunpack.c.l.b16 %v687
          %v725 = vunpack.c.l.b16 %v688
          %v726 = vpack.c.b16 %v711, %v710
          %v727 = vpack.c.b16 %v713, %v712
          %v728 = vpack.c.b16 %v715, %v714
          %v729 = vpack.c.b16 %v717, %v716
          %v730 = vpack.c.b16 %v719, %v718
          %v731 = vpack.c.b16 %v721, %v720
          %v732 = vpack.c.b16 %v723, %v722
          %v733 = vpack.c.b16 %v725, %v724
          %742 = vmatpush.bf16.msra.mxu0 %v733
          %743 = vmatpush.bf16.msra.mxu0 %v732
          %744 = vmatpush.bf16.msra.mxu0 %v731
          %745 = vmatpush.bf16.msra.mxu0 %v730
          %746 = vmatpush.bf16.msra.mxu0 %v729
          %747 = vmatpush.bf16.msra.mxu0 %v728
          %748 = vmatpush.bf16.msra.mxu0 %v727
          %749 = vmatpush.bf16.msra.mxu0 %v726
          %750 = vmatmul.bf16.gmra.mxu0 %v671
          %v751 = vpop.f32.mrf.mxu0
          %v752 = vadd.f32 %v692, %v751
          %v753 = vpop.f32.mrf.mxu0
          %754 = vdwg.mxu0
          %755 = vst [vmem:[%s291 + $0x8] sm:$0xff] %v752
          %v756 = vld [vmem:[#allocation2 + $0x10] sm:$0xff]
          %v757 = vld [vmem:[#allocation2 + $0x18] sm:$0xff]
          %v758 = vpack.c.bf16 %v757, %v756
          %s759 = scalar_lea.vmem [#allocation8], 128
          %v760 = vld [vmem:[%s759] sm:$0xf]
          %v761 = vld [vmem:[%s759 + $0x4] sm:$0xf]
          %v762 = vld [vmem:[%s759 + $0x8] sm:$0xf]
          %v763 = vld [vmem:[%s759 + $0xc] sm:$0xf]
          %v764 = vld [vmem:[%s759 + $0x10] sm:$0xf]
          %v765 = vld [vmem:[%s759 + $0x14] sm:$0xf]
          %v766 = vld [vmem:[%s759 + $0x18] sm:$0xf]
          %v767 = vld [vmem:[%s759 + $0x1c] sm:$0xf]
          %v768 = vld [vmem:[%s759 + $0x20] sm:$0xf]
          %v769 = vld [vmem:[%s759 + $0x24] sm:$0xf]
          %v770 = vld [vmem:[%s759 + $0x28] sm:$0xf]
          %v771 = vld [vmem:[%s759 + $0x2c] sm:$0xf]
          %v772 = vld [vmem:[%s759 + $0x30] sm:$0xf]
          %v773 = vld [vmem:[%s759 + $0x34] sm:$0xf]
          %v774 = vld [vmem:[%s759 + $0x38] sm:$0xf]
          %v775 = vld [vmem:[%s759 + $0x3c] sm:$0xf]
          %s776 = scalar_lea.vmem [#allocation9], 2
          %v777 = vld [vmem:[%s776] sm:$0x1]
          %v779 = vperm.slane %v777, 0
          %v797 = vunpack.c.l.b16 %v760
          %v798 = vunpack.c.l.b16 %v761
          %v799 = vunpack.c.l.b16 %v762
          %v800 = vunpack.c.l.b16 %v763
          %v801 = vunpack.c.l.b16 %v764
          %v802 = vunpack.c.l.b16 %v765
          %v803 = vunpack.c.l.b16 %v766
          %v804 = vunpack.c.l.b16 %v767
          %v805 = vunpack.c.l.b16 %v768
          %v806 = vunpack.c.l.b16 %v769
          %v807 = vunpack.c.l.b16 %v770
          %v808 = vunpack.c.l.b16 %v771
          %v809 = vunpack.c.l.b16 %v772
          %v810 = vunpack.c.l.b16 %v773
          %v811 = vunpack.c.l.b16 %v774
          %v812 = vunpack.c.l.b16 %v775
          %v813 = vpack.c.b16 %v798, %v797
          %v814 = vpack.c.b16 %v800, %v799
          %v815 = vpack.c.b16 %v802, %v801
          %v816 = vpack.c.b16 %v804, %v803
          %v817 = vpack.c.b16 %v806, %v805
          %v818 = vpack.c.b16 %v808, %v807
          %v819 = vpack.c.b16 %v810, %v809
          %v820 = vpack.c.b16 %v812, %v811
          %829 = vmatpush.bf16.msra.mxu0 %v820
          %830 = vmatpush.bf16.msra.mxu0 %v819
          %831 = vmatpush.bf16.msra.mxu0 %v818
          %832 = vmatpush.bf16.msra.mxu0 %v817
          %833 = vmatpush.bf16.msra.mxu0 %v816
          %834 = vmatpush.bf16.msra.mxu0 %v815
          %835 = vmatpush.bf16.msra.mxu0 %v814
          %836 = vmatpush.bf16.msra.mxu0 %v813
          %837 = vmatmul.bf16.gmra.mxu0 %v758
          %v838 = vpop.f32.mrf.mxu0
          %v839 = vadd.f32 %v779, %v838
          %v840 = vpop.f32.mrf.mxu0
          %v841 = vadd.f32 %v779, %v840
          %842 = vdwg.mxu0
          %843 = vst [vmem:[%s291 + $0x10] sm:$0xff] %v839
          %844 = vst [vmem:[%s291 + $0x18] sm:$0xff] %v841
          %v845 = vld [vmem:[#allocation2 + $0x20] sm:$0xff]
          %v846 = vld [vmem:[#allocation2 + $0x28] sm:$0xff]
          %v847 = vld [vmem:[#allocation2 + $0x30] sm:$0xff]
          %v848 = vld [vmem:[#allocation2 + $0x38] sm:$0xff]
          %v849 = vld [vmem:[#allocation2 + $0x40] sm:$0xff]
          %v850 = vpack.c.bf16 %v846, %v845
          %v851 = vpack.c.bf16 %v848, %v847
          %v852 = vpack.c.bf16 %v849, %v849
          %s853 = scalar_lea.vmem [#allocation8], 192
          %v854 = vld [vmem:[%s853] sm:$0xf]
          %v855 = vld [vmem:[%s853 + $0x4] sm:$0xf]
          %v856 = vld [vmem:[%s853 + $0x8] sm:$0xf]
          %v857 = vld [vmem:[%s853 + $0xc] sm:$0xf]
          %v858 = vld [vmem:[%s853 + $0x10] sm:$0xf]
          %v859 = vld [vmem:[%s853 + $0x14] sm:$0xf]
          %v860 = vld [vmem:[%s853 + $0x18] sm:$0xf]
          %v861 = vld [vmem:[%s853 + $0x1c] sm:$0xf]
          %v862 = vld [vmem:[%s853 + $0x20] sm:$0xf]
          %v863 = vld [vmem:[%s853 + $0x24] sm:$0xf]
          %v864 = vld [vmem:[%s853 + $0x28] sm:$0xf]
          %v865 = vld [vmem:[%s853 + $0x2c] sm:$0xf]
          %v866 = vld [vmem:[%s853 + $0x30] sm:$0xf]
          %v867 = vld [vmem:[%s853 + $0x34] sm:$0xf]
          %v868 = vld [vmem:[%s853 + $0x38] sm:$0xf]
          %v869 = vld [vmem:[%s853 + $0x3c] sm:$0xf]
          %s870 = scalar_lea.vmem [#allocation9], 3
          %v871 = vld [vmem:[%s870] sm:$0x1]
          %v873 = vperm.slane %v871, 0
          %v891 = vunpack.c.l.b16 %v854
          %v892 = vunpack.c.l.b16 %v855
          %v893 = vunpack.c.l.b16 %v856
          %v894 = vunpack.c.l.b16 %v857
          %v895 = vunpack.c.l.b16 %v858
          %v896 = vunpack.c.l.b16 %v859
          %v897 = vunpack.c.l.b16 %v860
          %v898 = vunpack.c.l.b16 %v861
          %v899 = vunpack.c.l.b16 %v862
          %v900 = vunpack.c.l.b16 %v863
          %v901 = vunpack.c.l.b16 %v864
          %v902 = vunpack.c.l.b16 %v865
          %v903 = vunpack.c.l.b16 %v866
          %v904 = vunpack.c.l.b16 %v867
          %v905 = vunpack.c.l.b16 %v868
          %v906 = vunpack.c.l.b16 %v869
          %v907 = vpack.c.b16 %v892, %v891
          %v908 = vpack.c.b16 %v894, %v893
          %v909 = vpack.c.b16 %v896, %v895
          %v910 = vpack.c.b16 %v898, %v897
          %v911 = vpack.c.b16 %v900, %v899
          %v912 = vpack.c.b16 %v902, %v901
          %v913 = vpack.c.b16 %v904, %v903
          %v914 = vpack.c.b16 %v906, %v905
          %923 = vmatpush.bf16.msra.mxu0 %v914
          %924 = vmatpush.bf16.msra.mxu0 %v913
          %925 = vmatpush.bf16.msra.mxu0 %v912
          %926 = vmatpush.bf16.msra.mxu0 %v911
          %927 = vmatpush.bf16.msra.mxu0 %v910
          %928 = vmatpush.bf16.msra.mxu0 %v909
          %929 = vmatpush.bf16.msra.mxu0 %v908
          %930 = vmatpush.bf16.msra.mxu0 %v907
          %931 = vmatmul.bf16.gmra.mxu0 %v850
          %v932 = vpop.f32.mrf.mxu0
          %v933 = vadd.f32 %v873, %v932
          %v934 = vpop.f32.mrf.mxu0
          %v935 = vadd.f32 %v873, %v934
          %936 = vmatmul.bf16.gmra.mxu0 %v851
          %v937 = vpop.f32.mrf.mxu0
          %v938 = vadd.f32 %v873, %v937
          %v939 = vpop.f32.mrf.mxu0
          %v940 = vadd.f32 %v873, %v939
          %941 = vmatmul.bf16.gmra.mxu0 %v852
          %v942 = vpop.f32.mrf.mxu0
          %v943 = vadd.f32 %v873, %v942
          %v944 = vpop.f32.mrf.mxu0
          %945 = vdwg.mxu0
          %946 = vst [vmem:[%s291 + $0x20] sm:$0xff] %v933
          %947 = vst [vmem:[%s291 + $0x28] sm:$0xff] %v935
          %948 = vst [vmem:[%s291 + $0x30] sm:$0xff] %v938
          %949 = vst [vmem:[%s291 + $0x38] sm:$0xff] %v940
          %950 = vst [vmem:[%s291 + $0x40] sm:$0xff] %v943
        $region60: #{tpu_custom_call.1} parent=35 // pred_fallthru
          _
        %s951 = sand.u32 %s139, 1
        %s952 = scalar_lea.sflag [#allocation5], %s951
        %s953 = sand.u32 %s139, 1
        %s954 = smul.addr %s953, 72
        %s955 = scalar_lea.vmem [#allocation11], %s954
        // Predicated region
        $region61: #{tpu_custom_call.1} parent=35 // pred_check
          %p956 = pneg %p149
        $region62: #{tpu_custom_call.1} parent=35 // pred_check_branch
          %958 = sbr.rel (%p956) target = $region64
        $region63: #{tpu_custom_call.1} parent=35 // pred_region
          %960 = vsyncadd %s952, 0
          %s961 = smul.addr %s27, 9
          %s962 = smul.addr %s961, 8
          %s963 = scalar_lea.hbm %s4, %s962
          %s964 = sshll.u32 %s955, 4
          %s965 = int_to_ptr.vmem [resolvable:$true] %s964
          %s966 = sshll.u32 %s963, 4
          %s967 = int_to_ptr.hbm [resolvable:$true] %s966
          %972 = dma.vmem_to_hbm [thread:$0]  %s965, 1152, %s967, %s952, 128, 128, 8
        $region64: #{tpu_custom_call.1} parent=35 // pred_fallthru
          _
      $region36: #{tpu_custom_call.1} parent=5 // pred_fallthru
        _
      %p973 = scmp.le.s32.totalorder 2, %s18
      // Predicated region
      $region65: #{tpu_custom_call.1} parent=5 // pred_check
        %p974 = pneg %p973
      $region66: #{tpu_custom_call.1} parent=5 // pred_check_branch
        %976 = sbr.rel (%p974) target = $region68
      $region67: #{tpu_custom_call.1} parent=5 // pred_region
        %s977 = ssub.s32 %s18, 2
        // Predicated region
        $region69: #{tpu_custom_call.1} parent=67 // pred_check
          %p978 = pneg %p155
        $region70: #{tpu_custom_call.1} parent=67 // pred_check_branch
          %980 = sbr.rel (%p978) target = $region72
        $region71: #{tpu_custom_call.1} parent=67 // pred_region
          %s981 = sand.u32 %s140, 1
          %s982 = scalar_lea.sflag [#allocation5], %s981
          %s983 = sand.u32 %s140, 1
          %s984 = smul.addr %s983, 72
          %s985 = scalar_lea.vmem [#allocation11], %s984
          %987 = dma.done %s982, 1152
        $region72: #{tpu_custom_call.1} parent=67 // pred_fallthru
          _
      $region68: #{tpu_custom_call.1} parent=5 // pred_fallthru
        _
    $region6: #{tpu_custom_call.1} parent=1 // loop_footer
      %s22 = sadd.s32 1, %s18
    $region7: #{tpu_custom_call.1} parent=1 // loop_footer_branch
      %17 = sbr.rel target = $region3
    $region8: #{tpu_custom_call.1} parent=1 // loop_exit
      _
    %988 = vsyncpa [#allocation4], 1
    %s989 = scalar_lea.sflag [#allocation4], 1
    %990 = vsyncpa %s989, 1
    %991 = vsyncpa [#allocation7], 1
    %992 = vsyncpa [#allocation10], 1
    %993 = vsyncpa [#allocation5], 1
    %s994 = scalar_lea.sflag [#allocation5], 1
    %995 = vsyncpa %s994, 1

</llo_original>
